<compile_context>
chip_gen: v7x
topology: tpu7x:2x2x1
jax: 0.10.0
libtpu: 0.0.40
codegen_flags: <defaults>
</compile_context>

<pallas_src>
import functools

import jax
import jax.numpy as jnp
from jax import lax
from jax.experimental import pallas as pl
from jax.experimental.pallas import tpu as pltpu


def _round_up(x: int, m: int) -> int:
    return ((x + m - 1) // m) * m


def _l2_normalize(x):
    sq = jnp.sum(x * x, axis=-1, keepdims=True)
    return x * lax.rsqrt(jnp.maximum(sq, jnp.float32(1e-12)))


def _vmem_limit_bytes() -> int:
    # Generation-aware headroom: v5e/v6e have 128 MiB physical VMEM per core,
    # v7x only 64 MiB.  Our footprint is a few MiB, so take the smaller of
    # 48 MiB and 75% of the reported capacity.
    try:
        cap = int(pltpu.get_tpu_info().vmem_capacity_bytes)
    except Exception:
        cap = 64 * 1024 * 1024
    return int(min(48 * 1024 * 1024, (cap * 3) // 4))


def _nt_xent_kernel(
    zi_ref, zj_ref, keys_ref, bias_ref,            # inputs
    out_ref,                                        # output: (1, 8, 128) partials
    m_i, l_i, m_j, l_j, self_i, self_j,             # scratch: online-lse state
    *, batch_size: int, b_pad: int, row_tile: int, key_tile: int,
    inv_temp: float, has_pad: bool,
):
    q = pl.program_id(0)
    k = pl.program_id(1)
    nk = pl.num_programs(1)
    inv_t = jnp.float32(inv_temp)
    neg_big = jnp.float32(-1e30)

    q_start = q * row_tile
    k_start = k * key_tile

    # ---- init (once per row tile): reset online-logsumexp state ----
    @pl.when(k == 0)
    def _init():
        m_i[...] = jnp.full_like(m_i, neg_big)
        l_i[...] = jnp.zeros_like(l_i)
        m_j[...] = jnp.full_like(m_j, neg_big)
        l_j[...] = jnp.zeros_like(l_j)
        self_i[...] = jnp.full_like(self_i, neg_big)
        self_j[...] = jnp.full_like(self_j, neg_big)

    # ---- similarities for this (row tile, key tile): 2 MXU matmuls ----
    qi = zi_ref[...]                       # (row_tile, D), pre-normalized
    qj = zj_ref[...]
    kblk = keys_ref[...]                   # (D, key_tile), pre-normalized/transposed
    dn = (((1,), (0,)), ((), ()))          # standard (M,K) x (K,N) contraction
    s_i = lax.dot_general(qi, kblk, dn, preferred_element_type=jnp.float32) * inv_t
    s_j = lax.dot_general(qj, kblk, dn, preferred_element_type=jnp.float32) * inv_t

    if has_pad:
        # Precomputed additive column bias: 0 for valid key columns, -1e30 for
        # padded ones.  One VPU add per vreg; no per-step iota/compare/select.
        bias = bias_ref[...]               # (1, key_tile) f32
        s_i = s_i + bias
        s_j = s_j + bias

    # ---- grab the self-similarity (diagonal) value, only on the single key
    #      tile that contains it; the hot path carries no diagonal masking ----
    diag_i_here = jnp.logical_and(q_start >= k_start, q_start < k_start + key_tile)
    diag_j_here = jnp.logical_and(b_pad + q_start >= k_start,
                                  b_pad + q_start < k_start + key_tile)

    @pl.when(diag_i_here)
    def _grab_self_i():
        cols = k_start + lax.broadcasted_iota(jnp.int32, (row_tile, key_tile), 1)
        rows = q_start + lax.broadcasted_iota(jnp.int32, (row_tile, key_tile), 0)
        self_i[...] = jnp.sum(jnp.where(cols == rows, s_i, 0.0),
                              axis=-1, keepdims=True)

    @pl.when(diag_j_here)
    def _grab_self_j():
        cols = k_start + lax.broadcasted_iota(jnp.int32, (row_tile, key_tile), 1)
        rows = (b_pad + q_start) + lax.broadcasted_iota(
            jnp.int32, (row_tile, key_tile), 0)
        self_j[...] = jnp.sum(jnp.where(cols == rows, s_j, 0.0),
                              axis=-1, keepdims=True)

    # ---- online logsumexp over streamed key tiles ----
    def _update(m_ref, l_ref, s):
        m_old = m_ref[...]
        m_new = jnp.maximum(m_old, jnp.max(s, axis=-1, keepdims=True))
        l_ref[...] = (l_ref[...] * jnp.exp(m_old - m_new)
                      + jnp.sum(jnp.exp(s - m_new), axis=-1, keepdims=True))
        m_ref[...] = m_new

    _update(m_i, l_i, s_i)                 # rows from the z_i half
    _update(m_j, l_j, s_j)                 # rows from the z_j half

    # ---- finalize (last key tile): per-row loss, lane-dense partial output ----
    @pl.when(k == nk - 1)
    def _finalize():
        # Positive pair: rows a and a+B share sim(z_i[a], z_j[a]) / T.
        pos = jnp.sum(qi.astype(jnp.float32) * qj.astype(jnp.float32),
                      axis=-1, keepdims=True) * inv_t
        # Remove the self column from the denominator: its exp contribution was
        # accumulated with the same running max, so this is exact up to f32
        # rounding.  The tiny clamp only guards pathological cancellation.
        tiny = jnp.float32(1e-30)
        l_i_ex = jnp.maximum(l_i[...] - jnp.exp(self_i[...] - m_i[...]), tiny)
        l_j_ex = jnp.maximum(l_j[...] - jnp.exp(self_j[...] - m_j[...]), tiny)
        lse_i = m_i[...] + jnp.log(l_i_ex)
        lse_j = m_j[...] + jnp.log(l_j_ex)
        per_row = (lse_i - pos) + (lse_j - pos)
        if has_pad:
            rows = q_start + lax.broadcasted_iota(jnp.int32, (row_tile, 1), 0)
            per_row = jnp.where(rows < batch_size, per_row, 0.0)
        out_ref[...] = jnp.full(out_ref.shape, jnp.sum(per_row), dtype=jnp.float32)


def nt_xent_loss(z_i: jax.Array, z_j: jax.Array, temperature: float,
                 *, use_bf16_matmul: bool = True) -> jax.Array:
    """SimCLR NT-Xent loss; z_i, z_j: (batch_size, D)."""
    assert z_i.shape == z_j.shape and z_i.ndim == 2
    b, d = z_i.shape
    n = 2 * b

    # Row tile <= 256, and >= 2 row tiles whenever b >= 16 so the v7x second
    # TensorCore ("parallel" axis) has work.  Key tile: up to 1024 columns to
    # amortize per-grid-step overhead; multiple of 128 (BlockSpec lane rule)
    # and of the row tile (so a row tile's diagonal lives in one key tile).
    if b >= 16:
        row_tile = min(256, _round_up((b + 1) // 2, 8))
    else:
        row_tile = _round_up(b, 8)
    b_pad = _round_up(b, row_tile)
    keys_total = 2 * b_pad
    if keys_total <= 1024:
        key_tile = keys_total
    elif keys_total % 1024 == 0:
        key_tile = 1024
    else:
        key_tile = 512                      # keys_total is a multiple of 512 here
    assert keys_total % key_tile == 0 and key_tile % row_tile == 0
    assert b_pad % row_tile == 0
    n_row_tiles = b_pad // row_tile
    n_key_tiles = keys_total // key_tile
    has_pad = b_pad > b

    store_dt = jnp.bfloat16 if use_bf16_matmul else jnp.float32

    # Normalize ONCE in f32 (wrapper side), pad, and pre-cast to the MXU dtype.
    zi_n = _l2_normalize(z_i.astype(jnp.float32))
    zj_n = _l2_normalize(z_j.astype(jnp.float32))
    if has_pad:
        pad = ((0, b_pad - b), (0, 0))
        zi_n = jnp.pad(zi_n, pad)
        zj_n = jnp.pad(zj_n, pad)
    zi_q = zi_n.astype(store_dt)
    zj_q = zj_n.astype(store_dt)
    # Keys: [z_i_pad; z_j_pad], pre-transposed to (D, 2*b_pad) so the kernel
    # runs a plain (row, D) x (D, key) MXU matmul (no per-step transpose).
    keys_t = jnp.concatenate([zi_n, zj_n], axis=0).T.astype(store_dt)
    # Additive column bias masking padded key columns (0 valid, -1e30 padded).
    col = jnp.arange(keys_total)
    pad_bias = jnp.where((col % b_pad) < b, 0.0, -1e30).astype(jnp.float32)
    pad_bias = pad_bias.reshape(1, keys_total)

    kernel = functools.partial(
        _nt_xent_kernel,
        batch_size=b, b_pad=b_pad, row_tile=row_tile, key_tile=key_tile,
        inv_temp=1.0 / float(temperature), has_pad=has_pad,
    )

    grid_spec = pltpu.PrefetchScalarGridSpec(
        num_scalar_prefetch=0,
        grid=(n_row_tiles, n_key_tiles),                          # (row, key)
        in_specs=[
            pl.BlockSpec((row_tile, d), lambda i, k: (i, 0)),     # z_i query rows
            pl.BlockSpec((row_tile, d), lambda i, k: (i, 0)),     # z_j query rows
            pl.BlockSpec((d, key_tile), lambda i, k: (0, k)),     # keys (transposed)
            pl.BlockSpec((1, key_tile), lambda i, k: (0, k)),     # pad column bias
        ],
        out_specs=pl.BlockSpec((1, 8, 128), lambda i, k: (i, 0, 0)),
        scratch_shapes=[
            pltpu.VMEM((row_tile, 1), jnp.float32),    # running max  (i-half rows)
            pltpu.VMEM((row_tile, 1), jnp.float32),    # running sum  (i-half rows)
            pltpu.VMEM((row_tile, 1), jnp.float32),    # running max  (j-half rows)
            pltpu.VMEM((row_tile, 1), jnp.float32),    # running sum  (j-half rows)
            pltpu.VMEM((row_tile, 1), jnp.float32),    # self-sim     (i-half rows)
            pltpu.VMEM((row_tile, 1), jnp.float32),    # self-sim     (j-half rows)
        ],
    )

    partials = pl.pallas_call(
        kernel,
        out_shape=jax.ShapeDtypeStruct((n_row_tiles, 8, 128), jnp.float32),
        grid_spec=grid_spec,
        compiler_params=pltpu.CompilerParams(
            dimension_semantics=("parallel", "arbitrary"),
            vmem_limit_bytes=_vmem_limit_bytes(),
        ),
    )(zi_q, zj_q, keys_t, pad_bias)

    return jnp.sum(partials[:, 0, 0]) / jnp.float32(n)


def _nt_xent_ref(z_i, z_j, temperature):
    # Pure-JAX reference mirroring the PyTorch module, for sanity checking.
    b = z_i.shape[0]
    n = 2 * b
    z = jnp.concatenate([z_i, z_j], axis=0).astype(jnp.float32)
    zn = z / jnp.linalg.norm(z, axis=-1, keepdims=True)
    sim = (zn @ zn.T) / temperature
    pos = jnp.concatenate([jnp.diagonal(sim, b), jnp.diagonal(sim, -b)])
    eye = jnp.eye(n, dtype=bool)
    lse = jax.scipy.special.logsumexp(jnp.where(eye, -jnp.inf, sim), axis=-1)
    return jnp.sum(lse - pos) / n


if __name__ == "__main__":
    temperature = 0.5
    key = jax.random.PRNGKey(0)
    ks = jax.random.split(key, 6)

    def _check(zi, zj, tag):
        ref = jax.block_until_ready(_nt_xent_ref(zi, zj, temperature))
        # f32 MXU path: tight tolerance.
        loss_f32 = jax.block_until_ready(
            nt_xent_loss(zi, zj, temperature, use_bf16_matmul=False))
        assert jnp.allclose(loss_f32, ref, rtol=1e-5, atol=1e-5), (tag, loss_f32, ref)
        # Default path (bf16 MXU operands, f32 accumulation): looser tolerance.
        loss_bf16 = jax.block_until_ready(nt_xent_loss(zi, zj, temperature))
        assert jnp.allclose(loss_bf16, ref, rtol=3e-2, atol=3e-2), (tag, loss_bf16, ref)

    # Case 1: module-scale shapes (batch=8, hidden=32); single row/key tile.
    b1, d1 = 8, 32
    _check(jax.random.normal(ks[0], (b1, d1), jnp.float32),
           jax.random.normal(ks[1], (b1, d1), jnp.float32), "small")

    # Case 2: row + key-column padding (b not a multiple of the row tile),
    # two row tiles (v7x megacore path), single key tile.
    b2, d2 = 100, 48
    _check(jax.random.normal(ks[2], (b2, d2), jnp.float32),
           jax.random.normal(ks[3], (b2, d2), jnp.float32), "padded")

    # Case 3: multi key-tile streaming (online logsumexp across key tiles),
    # 3 row tiles x 3 key tiles, padding, gated diagonal extraction.
    b3, d3 = 600, 64
    _check(jax.random.normal(ks[4], (b3, d3), jnp.float32),
           jax.random.normal(ks[5], (b3, d3), jnp.float32), "large")

    print("KERNEL_OK")
</pallas_src>

<mosaic_0001>
module attributes {stable_mosaic.version = 11 : i64} {
  func.func @_nt_xent_kernel(%arg0: i32, %arg1: i32, %arg2: memref<8x32xf32, #tpu.memory_space<vmem>>, %arg3: memref<8x32xf32, #tpu.memory_space<vmem>>, %arg4: memref<32x16xf32, #tpu.memory_space<vmem>>, %arg5: memref<1x16xf32, #tpu.memory_space<vmem>>, %arg6: memref<1x8x128xf32, #tpu.memory_space<vmem>>, %arg7: memref<8x1xf32, #tpu.memory_space<vmem>>, %arg8: memref<8x1xf32, #tpu.memory_space<vmem>>, %arg9: memref<8x1xf32, #tpu.memory_space<vmem>>, %arg10: memref<8x1xf32, #tpu.memory_space<vmem>>, %arg11: memref<8x1xf32, #tpu.memory_space<vmem>>, %arg12: memref<8x1xf32, #tpu.memory_space<vmem>>) attributes {dimension_semantics = [#tpu.dimension_semantics<parallel>, #tpu.dimension_semantics<arbitrary>], iteration_bounds = array<i64: 1, 1>, scalar_prefetch = 0 : i64, scratch_operands = 6 : i64, tpu.core_type = #tpu.core_type<tc>, window_params = [{transform_indices = @transform_0, window_bounds = array<i64: 8, 32>}, {transform_indices = @transform_1, window_bounds = array<i64: 8, 32>}, {transform_indices = @transform_2, window_bounds = array<i64: 32, 16>}, {transform_indices = @transform_3, window_bounds = array<i64: 1, 16>}, {transform_indices = @transform_4, window_bounds = array<i64: 1, 8, 128>}]} {
    %c8_i32 = arith.constant 8 : i32
    %0 = arith.muli %arg0, %c8_i32 : i32
    %c16_i32 = arith.constant 16 : i32
    %1 = arith.muli %arg1, %c16_i32 : i32
    %c0_i32 = arith.constant 0 : i32
    %2 = arith.cmpi eq, %arg1, %c0_i32 : i32
    %3 = arith.extui %2 : i1 to i32
    %cst = arith.constant -1.000000e+30 : f32
    %c0_i32_0 = arith.constant 0 : i32
    %4 = arith.cmpi ne, %3, %c0_i32_0 : i32
    scf.if %4 {
      %63 = vector.broadcast %cst : f32 to vector<8x1xf32>
      %c0_39 = arith.constant 0 : index
      %c0_40 = arith.constant 0 : index
      %64 = vector.load %arg7[%c0_39, %c0_40] : memref<8x1xf32, #tpu.memory_space<vmem>>, vector<8x1xf32>
      tpu.vector_store %arg7[%c0_39, %c0_40], %63 {strides = array<i32>} : memref<8x1xf32, #tpu.memory_space<vmem>>, vector<8x1xf32>,
      %cst_41 = arith.constant 0.000000e+00 : f32
      %65 = vector.broadcast %cst_41 : f32 to vector<8x1xf32>
      %c0_42 = arith.constant 0 : index
      %c0_43 = arith.constant 0 : index
      %66 = vector.load %arg8[%c0_42, %c0_43] : memref<8x1xf32, #tpu.memory_space<vmem>>, vector<8x1xf32>
      tpu.vector_store %arg8[%c0_42, %c0_43], %65 {strides = array<i32>} : memref<8x1xf32, #tpu.memory_space<vmem>>, vector<8x1xf32>,
      %67 = vector.broadcast %cst : f32 to vector<8x1xf32>
      %c0_44 = arith.constant 0 : index
      %c0_45 = arith.constant 0 : index
      %68 = vector.load %arg9[%c0_44, %c0_45] : memref<8x1xf32, #tpu.memory_space<vmem>>, vector<8x1xf32>
      tpu.vector_store %arg9[%c0_44, %c0_45], %67 {strides = array<i32>} : memref<8x1xf32, #tpu.memory_space<vmem>>, vector<8x1xf32>,
      %cst_46 = arith.constant 0.000000e+00 : f32
      %69 = vector.broadcast %cst_46 : f32 to vector<8x1xf32>
      %c0_47 = arith.constant 0 : index
      %c0_48 = arith.constant 0 : index
      %70 = vector.load %arg10[%c0_47, %c0_48] : memref<8x1xf32, #tpu.memory_space<vmem>>, vector<8x1xf32>
      tpu.vector_store %arg10[%c0_47, %c0_48], %69 {strides = array<i32>} : memref<8x1xf32, #tpu.memory_space<vmem>>, vector<8x1xf32>,
      %71 = vector.broadcast %cst : f32 to vector<8x1xf32>
      %c0_49 = arith.constant 0 : index
      %c0_50 = arith.constant 0 : index
      %72 = vector.load %arg11[%c0_49, %c0_50] : memref<8x1xf32, #tpu.memory_space<vmem>>, vector<8x1xf32>
      tpu.vector_store %arg11[%c0_49, %c0_50], %71 {strides = array<i32>} : memref<8x1xf32, #tpu.memory_space<vmem>>, vector<8x1xf32>,
      %73 = vector.broadcast %cst : f32 to vector<8x1xf32>
      %c0_51 = arith.constant 0 : index
      %c0_52 = arith.constant 0 : index
      %74 = vector.load %arg12[%c0_51, %c0_52] : memref<8x1xf32, #tpu.memory_space<vmem>>, vector<8x1xf32>
      tpu.vector_store %arg12[%c0_51, %c0_52], %73 {strides = array<i32>} : memref<8x1xf32, #tpu.memory_space<vmem>>, vector<8x1xf32>,
    } else {
    }
    %c0 = arith.constant 0 : index
    %c0_1 = arith.constant 0 : index
    %5 = vector.load %arg2[%c0, %c0_1] : memref<8x32xf32, #tpu.memory_space<vmem>>, vector<8x32xf32>
    %c0_2 = arith.constant 0 : index
    %c0_3 = arith.constant 0 : index
    %6 = vector.load %arg3[%c0_2, %c0_3] : memref<8x32xf32, #tpu.memory_space<vmem>>, vector<8x32xf32>
    %c0_4 = arith.constant 0 : index
    %c0_5 = arith.constant 0 : index
    %7 = vector.load %arg4[%c0_4, %c0_5] : memref<32x16xf32, #tpu.memory_space<vmem>>, vector<32x16xf32>
    %cst_6 = arith.constant dense<0.000000e+00> : vector<8x16xf32>
    %8 = tpu.matmul %5, %7, %cst_6 {dimension_numbers = #tpu.dot_dimension_numbers<[1], [0], [0], [1], [0, 0, 1, 1], [], []>} : vector<8x32xf32>, vector<32x16xf32>, vector<8x16xf32> -> vector<8x16xf32>
    %cst_7 = arith.constant 2.000000e+00 : f32
    %9 = vector.broadcast %cst_7 : f32 to vector<8x16xf32>
    %10 = arith.mulf %8, %9 : vector<8x16xf32>
    %cst_8 = arith.constant dense<0.000000e+00> : vector<8x16xf32>
    %11 = tpu.matmul %6, %7, %cst_8 {dimension_numbers = #tpu.dot_dimension_numbers<[1], [0], [0], [1], [0, 0, 1, 1], [], []>} : vector<8x32xf32>, vector<32x16xf32>, vector<8x16xf32> -> vector<8x16xf32>
    %cst_9 = arith.constant 2.000000e+00 : f32
    %12 = vector.broadcast %cst_9 : f32 to vector<8x16xf32>
    %13 = arith.mulf %11, %12 : vector<8x16xf32>
    %14 = arith.cmpi sge, %0, %1 : i32
    %c16_i32_10 = arith.constant 16 : i32
    %15 = arith.addi %1, %c16_i32_10 : i32
    %16 = arith.cmpi slt, %0, %15 : i32
    %17 = arith.andi %14, %16 : i1
    %c8_i32_11 = arith.constant 8 : i32
    %18 = arith.addi %c8_i32_11, %0 : i32
    %19 = arith.cmpi sge, %18, %1 : i32
    %c8_i32_12 = arith.constant 8 : i32
    %20 = arith.addi %c8_i32_12, %0 : i32
    %c16_i32_13 = arith.constant 16 : i32
    %21 = arith.addi %1, %c16_i32_13 : i32
    %22 = arith.cmpi slt, %20, %21 : i32
    %23 = arith.andi %19, %22 : i1
    %24 = arith.extui %17 : i1 to i32
    %c0_i32_14 = arith.constant 0 : i32
    %25 = arith.cmpi ne, %24, %c0_i32_14 : i32
    scf.if %25 {
      %63 = tpu.iota {dimensions = array<i32: 1>} : vector<8x16xi32>
      %64 = vector.broadcast %1 : i32 to vector<8x16xi32>
      %65 = arith.addi %64, %63 : vector<8x16xi32>
      %66 = tpu.iota {dimensions = array<i32: 0>} : vector<8x16xi32>
      %67 = vector.broadcast %0 : i32 to vector<8x16xi32>
      %68 = arith.addi %67, %66 : vector<8x16xi32>
      %69 = arith.cmpi eq, %65, %68 : vector<8x16xi32>
      %cst_39 = arith.constant 0.000000e+00 : f32
      %70 = vector.broadcast %cst_39 : f32 to vector<8x16xf32>
      %71 = arith.select %69, %10, %70 : vector<8x16xi1>, vector<8x16xf32>
      %cst_40 = arith.constant dense<0.000000e+00> : vector<8xf32>
      %72 = vector.multi_reduction <add>, %71, %cst_40 [1] : vector<8x16xf32> to vector<8xf32>
      %73 = vector.shape_cast %72 : vector<8xf32> to vector<8x1xf32>
      %c0_41 = arith.constant 0 : index
      %c0_42 = arith.constant 0 : index
      %74 = vector.load %arg11[%c0_41, %c0_42] : memref<8x1xf32, #tpu.memory_space<vmem>>, vector<8x1xf32>
      tpu.vector_store %arg11[%c0_41, %c0_42], %73 {strides = array<i32>} : memref<8x1xf32, #tpu.memory_space<vmem>>, vector<8x1xf32>,
    } else {
    }
    %26 = arith.extui %23 : i1 to i32
    %c0_i32_15 = arith.constant 0 : i32
    %27 = arith.cmpi ne, %26, %c0_i32_15 : i32
    scf.if %27 {
      %63 = tpu.iota {dimensions = array<i32: 1>} : vector<8x16xi32>
      %64 = vector.broadcast %1 : i32 to vector<8x16xi32>
      %65 = arith.addi %64, %63 : vector<8x16xi32>
      %c8_i32_39 = arith.constant 8 : i32
      %66 = arith.addi %c8_i32_39, %0 : i32
      %67 = tpu.iota {dimensions = array<i32: 0>} : vector<8x16xi32>
      %68 = vector.broadcast %66 : i32 to vector<8x16xi32>
      %69 = arith.addi %68, %67 : vector<8x16xi32>
      %70 = arith.cmpi eq, %65, %69 : vector<8x16xi32>
      %cst_40 = arith.constant 0.000000e+00 : f32
      %71 = vector.broadcast %cst_40 : f32 to vector<8x16xf32>
      %72 = arith.select %70, %13, %71 : vector<8x16xi1>, vector<8x16xf32>
      %cst_41 = arith.constant dense<0.000000e+00> : vector<8xf32>
      %73 = vector.multi_reduction <add>, %72, %cst_41 [1] : vector<8x16xf32> to vector<8xf32>
      %74 = vector.shape_cast %73 : vector<8xf32> to vector<8x1xf32>
      %c0_42 = arith.constant 0 : index
      %c0_43 = arith.constant 0 : index
      %75 = vector.load %arg12[%c0_42, %c0_43] : memref<8x1xf32, #tpu.memory_space<vmem>>, vector<8x1xf32>
      tpu.vector_store %arg12[%c0_42, %c0_43], %74 {strides = array<i32>} : memref<8x1xf32, #tpu.memory_space<vmem>>, vector<8x1xf32>,
    } else {
    }
    %c0_16 = arith.constant 0 : index
    %c0_17 = arith.constant 0 : index
    %28 = vector.load %arg7[%c0_16, %c0_17] : memref<8x1xf32, #tpu.memory_space<vmem>>, vector<8x1xf32>
    %cst_18 = arith.constant dense<0xFF800000> : vector<8xf32>
    %29 = vector.multi_reduction <maximumf>, %10, %cst_18 [1] : vector<8x16xf32> to vector<8xf32>
    %30 = vector.shape_cast %29 : vector<8xf32> to vector<8x1xf32>
    %31 = arith.maximumf %28, %30 : vector<8x1xf32>
    %c0_19 = arith.constant 0 : index
    %c0_20 = arith.constant 0 : index
    %32 = vector.load %arg8[%c0_19, %c0_20] : memref<8x1xf32, #tpu.memory_space<vmem>>, vector<8x1xf32>
    %33 = arith.subf %28, %31 : vector<8x1xf32>
    %34 = math.exp %33 : vector<8x1xf32>
    %35 = arith.mulf %32, %34 : vector<8x1xf32>
    %36 = vector.broadcast %31 : vector<8x1xf32> to vector<8x16xf32>
    %37 = arith.subf %10, %36 : vector<8x16xf32>
    %38 = math.exp %37 : vector<8x16xf32>
    %cst_21 = arith.constant dense<0.000000e+00> : vector<8xf32>
    %39 = vector.multi_reduction <add>, %38, %cst_21 [1] : vector<8x16xf32> to vector<8xf32>
    %40 = vector.shape_cast %39 : vector<8xf32> to vector<8x1xf32>
    %41 = arith.addf %35, %40 : vector<8x1xf32>
    %c0_22 = arith.constant 0 : index
    %c0_23 = arith.constant 0 : index
    %42 = vector.load %arg8[%c0_22, %c0_23] : memref<8x1xf32, #tpu.memory_space<vmem>>, vector<8x1xf32>
    tpu.vector_store %arg8[%c0_22, %c0_23], %41 {strides = array<i32>} : memref<8x1xf32, #tpu.memory_space<vmem>>, vector<8x1xf32>,
    %c0_24 = arith.constant 0 : index
    %c0_25 = arith.constant 0 : index
    %43 = vector.load %arg7[%c0_24, %c0_25] : memref<8x1xf32, #tpu.memory_space<vmem>>, vector<8x1xf32>
    tpu.vector_store %arg7[%c0_24, %c0_25], %31 {strides = array<i32>} : memref<8x1xf32, #tpu.memory_space<vmem>>, vector<8x1xf32>,
    %c0_26 = arith.constant 0 : index
    %c0_27 = arith.constant 0 : index
    %44 = vector.load %arg9[%c0_26, %c0_27] : memref<8x1xf32, #tpu.memory_space<vmem>>, vector<8x1xf32>
    %cst_28 = arith.constant dense<0xFF800000> : vector<8xf32>
    %45 = vector.multi_reduction <maximumf>, %13, %cst_28 [1] : vector<8x16xf32> to vector<8xf32>
    %46 = vector.shape_cast %45 : vector<8xf32> to vector<8x1xf32>
    %47 = arith.maximumf %44, %46 : vector<8x1xf32>
    %c0_29 = arith.constant 0 : index
    %c0_30 = arith.constant 0 : index
    %48 = vector.load %arg10[%c0_29, %c0_30] : memref<8x1xf32, #tpu.memory_space<vmem>>, vector<8x1xf32>
    %49 = arith.subf %44, %47 : vector<8x1xf32>
    %50 = math.exp %49 : vector<8x1xf32>
    %51 = arith.mulf %48, %50 : vector<8x1xf32>
    %52 = vector.broadcast %47 : vector<8x1xf32> to vector<8x16xf32>
    %53 = arith.subf %13, %52 : vector<8x16xf32>
    %54 = math.exp %53 : vector<8x16xf32>
    %cst_31 = arith.constant dense<0.000000e+00> : vector<8xf32>
    %55 = vector.multi_reduction <add>, %54, %cst_31 [1] : vector<8x16xf32> to vector<8xf32>
    %56 = vector.shape_cast %55 : vector<8xf32> to vector<8x1xf32>
    %57 = arith.addf %51, %56 : vector<8x1xf32>
    %c0_32 = arith.constant 0 : index
    %c0_33 = arith.constant 0 : index
    %58 = vector.load %arg10[%c0_32, %c0_33] : memref<8x1xf32, #tpu.memory_space<vmem>>, vector<8x1xf32>
    tpu.vector_store %arg10[%c0_32, %c0_33], %57 {strides = array<i32>} : memref<8x1xf32, #tpu.memory_space<vmem>>, vector<8x1xf32>,
    %c0_34 = arith.constant 0 : index
    %c0_35 = arith.constant 0 : index
    %59 = vector.load %arg9[%c0_34, %c0_35] : memref<8x1xf32, #tpu.memory_space<vmem>>, vector<8x1xf32>
    tpu.vector_store %arg9[%c0_34, %c0_35], %47 {strides = array<i32>} : memref<8x1xf32, #tpu.memory_space<vmem>>, vector<8x1xf32>,
    %c0_i32_36 = arith.constant 0 : i32
    %60 = arith.cmpi eq, %arg1, %c0_i32_36 : i32
    %61 = arith.extui %60 : i1 to i32
    %cst_37 = arith.constant 2.000000e+00 : f32
    %c0_i32_38 = arith.constant 0 : i32
    %62 = arith.cmpi ne, %61, %c0_i32_38 : i32
    scf.if %62 {
      %63 = arith.mulf %5, %6 : vector<8x32xf32>
      %cst_39 = arith.constant dense<0.000000e+00> : vector<8xf32>
      %64 = vector.multi_reduction <add>, %63, %cst_39 [1] : vector<8x32xf32> to vector<8xf32>
      %65 = vector.shape_cast %64 : vector<8xf32> to vector<8x1xf32>
      %66 = vector.broadcast %cst_37 : f32 to vector<8x1xf32>
      %67 = arith.mulf %65, %66 : vector<8x1xf32>
      %c0_40 = arith.constant 0 : index
      %c0_41 = arith.constant 0 : index
      %68 = vector.load %arg8[%c0_40, %c0_41] : memref<8x1xf32, #tpu.memory_space<vmem>>, vector<8x1xf32>
      %c0_42 = arith.constant 0 : index
      %c0_43 = arith.constant 0 : index
      %69 = vector.load %arg11[%c0_42, %c0_43] : memref<8x1xf32, #tpu.memory_space<vmem>>, vector<8x1xf32>
      %c0_44 = arith.constant 0 : index
      %c0_45 = arith.constant 0 : index
      %70 = vector.load %arg7[%c0_44, %c0_45] : memref<8x1xf32, #tpu.memory_space<vmem>>, vector<8x1xf32>
      %71 = arith.subf %69, %70 : vector<8x1xf32>
      %72 = math.exp %71 : vector<8x1xf32>
      %73 = arith.subf %68, %72 : vector<8x1xf32>
      %cst_46 = arith.constant 1.000000e-30 : f32
      %74 = vector.broadcast %cst_46 : f32 to vector<8x1xf32>
      %75 = arith.maximumf %73, %74 : vector<8x1xf32>
      %c0_47 = arith.constant 0 : index
      %c0_48 = arith.constant 0 : index
      %76 = vector.load %arg10[%c0_47, %c0_48] : memref<8x1xf32, #tpu.memory_space<vmem>>, vector<8x1xf32>
      %c0_49 = arith.constant 0 : index
      %c0_50 = arith.constant 0 : index
      %77 = vector.load %arg12[%c0_49, %c0_50] : memref<8x1xf32, #tpu.memory_space<vmem>>, vector<8x1xf32>
      %c0_51 = arith.constant 0 : index
      %c0_52 = arith.constant 0 : index
      %78 = vector.load %arg9[%c0_51, %c0_52] : memref<8x1xf32, #tpu.memory_space<vmem>>, vector<8x1xf32>
      %79 = arith.subf %77, %78 : vector<8x1xf32>
      %80 = math.exp %79 : vector<8x1xf32>
      %81 = arith.subf %76, %80 : vector<8x1xf32>
      %cst_53 = arith.constant 1.000000e-30 : f32
      %82 = vector.broadcast %cst_53 : f32 to vector<8x1xf32>
      %83 = arith.maximumf %81, %82 : vector<8x1xf32>
      %c0_54 = arith.constant 0 : index
      %c0_55 = arith.constant 0 : index
      %84 = vector.load %arg7[%c0_54, %c0_55] : memref<8x1xf32, #tpu.memory_space<vmem>>, vector<8x1xf32>
      %85 = math.log %75 : vector<8x1xf32>
      %86 = arith.addf %84, %85 : vector<8x1xf32>
      %c0_56 = arith.constant 0 : index
      %c0_57 = arith.constant 0 : index
      %87 = vector.load %arg9[%c0_56, %c0_57] : memref<8x1xf32, #tpu.memory_space<vmem>>, vector<8x1xf32>
      %88 = math.log %83 : vector<8x1xf32>
      %89 = arith.addf %87, %88 : vector<8x1xf32>
      %90 = arith.subf %86, %67 : vector<8x1xf32>
      %91 = arith.subf %89, %67 : vector<8x1xf32>
      %92 = arith.addf %90, %91 : vector<8x1xf32>
      %93 = vector.shape_cast %92 : vector<8x1xf32> to vector<1x8x1xf32>
      %cst_58 = arith.constant dense<0.000000e+00> : vector<1xf32>
      %94 = vector.multi_reduction <add>, %93, %cst_58 [1, 2] : vector<1x8x1xf32> to vector<1xf32>
      %95 = vector.shape_cast %94 : vector<1xf32> to vector<1x1x1xf32>
      %96 = vector.extract %95[0, 0, 0] : f32 from vector<1x1x1xf32>
      %97 = vector.broadcast %96 : f32 to vector<1x8x128xf32>
      %c0_59 = arith.constant 0 : index
      %c0_60 = arith.constant 0 : index
      %c0_61 = arith.constant 0 : index
      %98 = vector.load %arg6[%c0_59, %c0_60, %c0_61] : memref<1x8x128xf32, #tpu.memory_space<vmem>>, vector<1x8x128xf32>
      tpu.vector_store %arg6[%c0_59, %c0_60, %c0_61], %97 {strides = array<i32>} : memref<1x8x128xf32, #tpu.memory_space<vmem>>, vector<1x8x128xf32>,
    } else {
    }
    return
  }
  func.func @transform_0(%arg0: i32, %arg1: i32) -> (i32, i32) {
    %c0_i32 = arith.constant 0 : i32
    %c0_i32_0 = arith.constant 0 : i32
    return %arg0, %c0_i32 : i32, i32
  }
  func.func @transform_1(%arg0: i32, %arg1: i32) -> (i32, i32) {
    %c0_i32 = arith.constant 0 : i32
    %c0_i32_0 = arith.constant 0 : i32
    return %arg0, %c0_i32 : i32, i32
  }
  func.func @transform_2(%arg0: i32, %arg1: i32) -> (i32, i32) {
    %c0_i32 = arith.constant 0 : i32
    %c0_i32_0 = arith.constant 0 : i32
    return %c0_i32, %arg1 : i32, i32
  }
  func.func @transform_3(%arg0: i32, %arg1: i32) -> (i32, i32) {
    %c0_i32 = arith.constant 0 : i32
    %c0_i32_0 = arith.constant 0 : i32
    return %c0_i32, %arg1 : i32, i32
  }
  func.func @transform_4(%arg0: i32, %arg1: i32) -> (i32, i32, i32) {
    %c0_i32 = arith.constant 0 : i32
    %c0_i32_0 = arith.constant 0 : i32
    %c0_i32_1 = arith.constant 0 : i32
    return %arg0, %c0_i32, %c0_i32_0 : i32, i32, i32
  }
}

</mosaic_0001>

<llo_original>
// kernel: tpu_custom_call.1
$region0: #{tpu_custom_call.1}
  #allocation0 [shape = 'u32[]', space=smem, size = 0x4, offset = 0x4, fixed_abs, tag = 'smem constant byte address 0x4 - core index']
  #allocation1 [shape = 'u32[144,128]{1,0:T(1,128)}', space=vmem, size = 0x12000, scoped, tag = 'internal scratch']
  #allocation2 [shape = 'f32[8,1]{1,0:T(8,128)}', space=vmem, size = 0x1000, scoped, tag = 'scratch operand']
  #allocation3 [shape = 'f32[8,1]{1,0:T(8,128)}', space=vmem, size = 0x1000, scoped, tag = 'scratch operand']
  #allocation4 [shape = 'f32[8,1]{1,0:T(8,128)}', space=vmem, size = 0x1000, scoped, tag = 'scratch operand']
  #allocation5 [shape = 'f32[8,1]{1,0:T(8,128)}', space=vmem, size = 0x1000, scoped, tag = 'scratch operand']
  #allocation6 [shape = 'f32[8,1]{1,0:T(8,128)}', space=vmem, size = 0x1000, scoped, tag = 'scratch operand']
  #allocation7 [shape = 'f32[8,1]{1,0:T(8,128)}', space=vmem, size = 0x1000, scoped, tag = 'scratch operand']
  %s0 = inlined_call_operand.vmem [shape: f32[8,32], index: 0, kind: input, shape index: {}]
  %s1 = inlined_call_operand.vmem [shape: f32[8,32], index: 1, kind: input, shape index: {}]
  %s2 = inlined_call_operand.vmem [shape: f32[32,16], index: 2, kind: input, shape index: {}]
  %s3 = inlined_call_operand.vmem [shape: f32[1,16], index: 3, kind: input, shape index: {}]
  %s4 = inlined_call_operand.hbm [shape: f32[1,8,128], index: 4, kind: output, shape index: {}]
  %s5 = sld [smem:[#allocation0]]
  $region42: #{tpu_custom_call.1} parent=0
    _
  %s7 = ssub.s32 1, %s5
  %s8 = scalar_select 0, %s7, %s5
  $region1: #{tpu_custom_call.1} parent=0
    #allocation8 [shape = 'u8[4096]{0}', space=vmem, size = 0x1000, scoped, tag = 'output window, operand 0, single buffered']
    #allocation9 [shape = 's32[1]{0}', space=sflag, size = 0x4, scoped, tag = 'scoped memory for tpu_custom_call.1']
    %9 = vsyncpa [#allocation9], 0
    // Predicated region
    $region2: #{tpu_custom_call.1} parent=1 // pred_check
      _
    $region3: #{tpu_custom_call.1} parent=1 // pred_check_branch
      %11 = sbr.rel (0) target = $region5
    $region4: #{tpu_custom_call.1} parent=1 // pred_region
      _
    $region5: #{tpu_custom_call.1} parent=1 // pred_fallthru
      _
    // Predicated region
    $region6: #{tpu_custom_call.1} parent=1 // pred_check
      _
    $region7: #{tpu_custom_call.1} parent=1 // pred_check_branch
      %13 = sbr.rel (0) target = $region9
    $region8: #{tpu_custom_call.1} parent=1 // pred_region
      _
    $region9: #{tpu_custom_call.1} parent=1 // pred_fallthru
      _
    // Predicated region
    $region10: #{tpu_custom_call.1} parent=1 // pred_check
      _
    $region11: #{tpu_custom_call.1} parent=1 // pred_check_branch
      %15 = sbr.rel (0) target = $region13
    $region12: #{tpu_custom_call.1} parent=1 // pred_region
      _
    $region13: #{tpu_custom_call.1} parent=1 // pred_fallthru
      _
    // Predicated region
    $region14: #{tpu_custom_call.1} parent=1 // pred_check
      _
    $region15: #{tpu_custom_call.1} parent=1 // pred_check_branch
      %17 = sbr.rel (0) target = $region17
    $region16: #{tpu_custom_call.1} parent=1 // pred_region
      _
    $region17: #{tpu_custom_call.1} parent=1 // pred_fallthru
      _
    %s18 = smul.u32 0, 8
    %s19 = smul.u32 0, 16
    %p20 = scmp.eq.s32.totalorder 0, 0
    // Predicated region
    $region18: #{tpu_custom_call.1} parent=1 // pred_check
      %p21 = pneg %p20
    $region19: #{tpu_custom_call.1} parent=1 // pred_check_branch
      %23 = sbr.rel (%p21) target = $region21
    $region20: #{tpu_custom_call.1} parent=1 // pred_region
      %vm24 = vcmask 7168
      %25 = vst.msk [vmem:[#allocation2] sm:$0xff] %vm24, -1e+30
      %26 = vst.msk [vmem:[#allocation3] sm:$0xff] %vm24, 0.0
      %27 = vst.msk [vmem:[#allocation4] sm:$0xff] %vm24, -1e+30
      %28 = vst.msk [vmem:[#allocation5] sm:$0xff] %vm24, 0.0
      %29 = vst.msk [vmem:[#allocation6] sm:$0xff] %vm24, -1e+30
      %30 = vst.msk [vmem:[#allocation7] sm:$0xff] %vm24, -1e+30
    $region21: #{tpu_custom_call.1} parent=1 // pred_fallthru
      _
    %v31 = vld [vmem:[%s0] sm:$0xff]
    %v32 = vld [vmem:[%s1] sm:$0xff]
    %v33 = vld [vmem:[%s2] sm:$0xff]
    %v34 = vld [vmem:[%s2 + $0x8] sm:$0xff]
    %v35 = vld [vmem:[%s2 + $0x10] sm:$0xff]
    %v36 = vld [vmem:[%s2 + $0x18] sm:$0xff]
    %vm37 = vcmask 261120
    %v39 = vsel %vm37, %v31, 0
    %41 = vmatprep.subr.mxu0 0.0
    %42 = vmatpush1.msra.mxu0 %v33
    %43 = vmatprep.subr.mxu0 0.0
    %44 = vmatpush1.msra.mxu0 %v34
    %45 = vmatprep.subr.mxu0 0.0
    %46 = vmatpush1.msra.mxu0 %v35
    %47 = vmatprep.subr.mxu0 0.0
    %48 = vmatpush1.msra.mxu0 %v36
    %49 = vmatprep.subr.mxu0 0.0
    %50 = vmatpush1.msra.mxu0 0.0
    %51 = vmatprep.subr.mxu0 0.0
    %52 = vmatpush1.msra.mxu0 0.0
    %53 = vmatprep.subr.mxu0 0.0
    %54 = vmatpush1.msra.mxu0 0.0
    %55 = vmatprep.subr.mxu0 0.0
    %56 = vmatpush1.msra.mxu0 0.0
    %57 = vmatprep.subr.mxu0 0.0
    %58 = vmatpush1.msra.mxu0 0.0
    %59 = vmatprep.subr.mxu0 0.0
    %60 = vmatpush1.msra.mxu0 0.0
    %61 = vmatprep.subr.mxu0 0.0
    %62 = vmatpush1.msra.mxu0 0.0
    %63 = vmatprep.subr.mxu0 0.0
    %64 = vmatpush1.msra.mxu0 0.0
    %65 = vmatprep.subr.mxu0 0.0
    %66 = vmatpush1.msra.mxu0 0.0
    %67 = vmatprep.subr.mxu0 0.0
    %68 = vmatpush1.msra.mxu0 0.0
    %69 = vmatprep.subr.mxu0 0.0
    %70 = vmatpush1.msra.mxu0 0.0
    %71 = vmatprep.subr.mxu0 0.0
    %72 = vmatpush1.msra.mxu0 0.0
    %73 = vmatprep.subr.mxu0 0.0
    %74 = vmatpush1.msra.mxu0 0.0
    %75 = vmatprep.subr.mxu0 0.0
    %76 = vmatpush1.msra.mxu0 0.0
    %77 = vmatprep.subr.mxu0 0.0
    %78 = vmatpush1.msra.mxu0 0.0
    %79 = vmatprep.subr.mxu0 0.0
    %80 = vmatpush1.msra.mxu0 0.0
    %81 = vmatprep.subr.mxu0 0.0
    %82 = vmatpush1.msra.mxu0 0.0
    %83 = vmatprep.subr.mxu0 0.0
    %84 = vmatpush1.msra.mxu0 0.0
    %85 = vmatprep.subr.mxu0 0.0
    %86 = vmatpush1.msra.mxu0 0.0
    %87 = vmatprep.subr.mxu0 0.0
    %88 = vmatpush1.msra.mxu0 0.0
    %89 = vmatprep.subr.mxu0 0.0
    %90 = vmatpush1.msra.mxu0 0.0
    %91 = vmatprep.subr.mxu0 0.0
    %92 = vmatpush1.msra.mxu0 0.0
    %93 = vmatprep.subr.mxu0 0.0
    %94 = vmatpush1.msra.mxu0 0.0
    %95 = vmatprep.subr.mxu0 0.0
    %96 = vmatpush1.msra.mxu0 0.0
    %97 = vmatprep.subr.mxu0 0.0
    %98 = vmatpush1.msra.mxu0 0.0
    %99 = vmatprep.subr.mxu0 0.0
    %100 = vmatpush1.msra.mxu0 0.0
    %101 = vmatprep.subr.mxu0 0.0
    %102 = vmatpush1.msra.mxu0 0.0
    %103 = vmatprep.subr.mxu0 0.0
    %104 = vmatpush1.msra.mxu0 0.0
    %105 = vmatprep.mubr.f32.mxu0 0.0
    %106 = vmatmul.mubr.f32.gmra.mrb[0].mxu0 %v39
    %v107 = vpop.f32.mrb[0].mxu0
    %v108 = vadd.f32 0.0, %v107
    %v109 = vpop.f32.mrb[0].mxu0
    %110 = vdwg.mxu0
    %v111 = vmul.f32 %v108, 2.0
    %v113 = vsel %vm37, %v32, 0
    %115 = vmatprep.subr.mxu0 0.0
    %116 = vmatpush1.msra.mxu0 %v33
    %117 = vmatprep.subr.mxu0 0.0
    %118 = vmatpush1.msra.mxu0 %v34
    %119 = vmatprep.subr.mxu0 0.0
    %120 = vmatpush1.msra.mxu0 %v35
    %121 = vmatprep.subr.mxu0 0.0
    %122 = vmatpush1.msra.mxu0 %v36
    %123 = vmatprep.subr.mxu0 0.0
    %124 = vmatpush1.msra.mxu0 0.0
    %125 = vmatprep.subr.mxu0 0.0
    %126 = vmatpush1.msra.mxu0 0.0
    %127 = vmatprep.subr.mxu0 0.0
    %128 = vmatpush1.msra.mxu0 0.0
    %129 = vmatprep.subr.mxu0 0.0
    %130 = vmatpush1.msra.mxu0 0.0
    %131 = vmatprep.subr.mxu0 0.0
    %132 = vmatpush1.msra.mxu0 0.0
    %133 = vmatprep.subr.mxu0 0.0
    %134 = vmatpush1.msra.mxu0 0.0
    %135 = vmatprep.subr.mxu0 0.0
    %136 = vmatpush1.msra.mxu0 0.0
    %137 = vmatprep.subr.mxu0 0.0
    %138 = vmatpush1.msra.mxu0 0.0
    %139 = vmatprep.subr.mxu0 0.0
    %140 = vmatpush1.msra.mxu0 0.0
    %141 = vmatprep.subr.mxu0 0.0
    %142 = vmatpush1.msra.mxu0 0.0
    %143 = vmatprep.subr.mxu0 0.0
    %144 = vmatpush1.msra.mxu0 0.0
    %145 = vmatprep.subr.mxu0 0.0
    %146 = vmatpush1.msra.mxu0 0.0
    %147 = vmatprep.subr.mxu0 0.0
    %148 = vmatpush1.msra.mxu0 0.0
    %149 = vmatprep.subr.mxu0 0.0
    %150 = vmatpush1.msra.mxu0 0.0
    %151 = vmatprep.subr.mxu0 0.0
    %152 = vmatpush1.msra.mxu0 0.0
    %153 = vmatprep.subr.mxu0 0.0
    %154 = vmatpush1.msra.mxu0 0.0
    %155 = vmatprep.subr.mxu0 0.0
    %156 = vmatpush1.msra.mxu0 0.0
    %157 = vmatprep.subr.mxu0 0.0
    %158 = vmatpush1.msra.mxu0 0.0
    %159 = vmatprep.subr.mxu0 0.0
    %160 = vmatpush1.msra.mxu0 0.0
    %161 = vmatprep.subr.mxu0 0.0
    %162 = vmatpush1.msra.mxu0 0.0
    %163 = vmatprep.subr.mxu0 0.0
    %164 = vmatpush1.msra.mxu0 0.0
    %165 = vmatprep.subr.mxu0 0.0
    %166 = vmatpush1.msra.mxu0 0.0
    %167 = vmatprep.subr.mxu0 0.0
    %168 = vmatpush1.msra.mxu0 0.0
    %169 = vmatprep.subr.mxu0 0.0
    %170 = vmatpush1.msra.mxu0 0.0
    %171 = vmatprep.subr.mxu0 0.0
    %172 = vmatpush1.msra.mxu0 0.0
    %173 = vmatprep.subr.mxu0 0.0
    %174 = vmatpush1.msra.mxu0 0.0
    %175 = vmatprep.subr.mxu0 0.0
    %176 = vmatpush1.msra.mxu0 0.0
    %177 = vmatprep.subr.mxu0 0.0
    %178 = vmatpush1.msra.mxu0 0.0
    %179 = vmatprep.mubr.f32.mxu0 0.0
    %180 = vmatmul.mubr.f32.gmra.mrb[0].mxu0 %v113
    %v181 = vpop.f32.mrb[0].mxu0
    %v182 = vadd.f32 0.0, %v181
    %v183 = vpop.f32.mrb[0].mxu0
    %184 = vdwg.mxu0
    %v185 = vmul.f32 %v182, 2.0
    %p186 = scmp.ge.s32.totalorder %s18, %s19
    %s187 = sadd.s32 %s19, 16
    %p188 = scmp.lt.s32.totalorder %s18, %s187
    %p189 = pnand %p186, %p188
    %p190 = pneg %p189
    %s191 = sadd.s32 %s18, 8
    %p192 = scmp.ge.s32.totalorder %s191, %s19
    %p193 = scmp.lt.s32.totalorder %s191, %s187
    %p194 = pnand %p192, %p193
    %p195 = pneg %p194
    // Predicated region
    $region22: #{tpu_custom_call.1} parent=1 // pred_check
      _
    $region23: #{tpu_custom_call.1} parent=1 // pred_check_branch
      %197 = sbr.rel (%p189) target = $region25
    $region24: #{tpu_custom_call.1} parent=1 // pred_region
      %v198 = vlaneseq
      %v199 = vand.u32 %v198, 127
      %v200 = vstv %s19
      %v201 = vadd.s32 %v200, %v199
      %v202 = vlaneseq
      %v203 = vshrl.u32 %v202, 7
      %v204 = vstv %s18
      %v205 = vadd.s32 %v204, %v203
      %vm206 = vcmp.eq.s32.totalorder %v201, %v205
      %v207 = vsel %vm206, %v111, 0.0
      %vm208 = vcmask 130048
      %v209 = vsel %vm208, %v207, 0.0
      %210 = vadd.xlane.f32.xlu0 %v209
      %v211 = vpop.xlane.xlu0 %210
      %vm212 = vcmask 7168
      %213 = vst.msk [vmem:[#allocation6] sm:$0xff] %vm212, %v211
    $region25: #{tpu_custom_call.1} parent=1 // pred_fallthru
      _
    // Predicated region
    $region26: #{tpu_custom_call.1} parent=1 // pred_check
      _
    $region27: #{tpu_custom_call.1} parent=1 // pred_check_branch
      %215 = sbr.rel (%p194) target = $region29
    $region28: #{tpu_custom_call.1} parent=1 // pred_region
      %v216 = vlaneseq
      %v217 = vand.u32 %v216, 127
      %v218 = vstv %s19
      %v219 = vadd.s32 %v218, %v217
      %v220 = vlaneseq
      %v221 = vshrl.u32 %v220, 7
      %v222 = vstv %s191
      %v223 = vadd.s32 %v222, %v221
      %vm224 = vcmp.eq.s32.totalorder %v219, %v223
      %v225 = vsel %vm224, %v185, 0.0
      %vm226 = vcmask 130048
      %v227 = vsel %vm226, %v225, 0.0
      %228 = vadd.xlane.f32.xlu0 %v227
      %v229 = vpop.xlane.xlu0 %228
      %vm230 = vcmask 7168
      %231 = vst.msk [vmem:[#allocation7] sm:$0xff] %vm230, %v229
    $region29: #{tpu_custom_call.1} parent=1 // pred_fallthru
      _
    %v232 = vld [vmem:[#allocation2] sm:$0xff]
    %vm233 = vcmask 130048
    %v234 = vsel %vm233, %v111, -inf
    %235 = vmax.xlane.f32.xlu0 %v234
    %v236 = vpop.xlane.xlu0 %235
    %v237 = vmax.f32 %v232, %v236
    %v238 = vld [vmem:[#allocation3] sm:$0xff]
    %v239 = vsub.f32 %v232, %v237
    %v240 = vmul.f32 %v239, 1.442695
    %v241 = vpow.pop %v240
    %v242 = vmul.f32 %v238, %v241
    %244 = vset.pattern.permute.xlu0 0
    %245 = vperm.xlu0 %244, %v237
    %v246 = vpop.permute.xlu0 %245
    %v248 = vsub.f32 %v111, %v246
    %v249 = vmul.f32 %v248, 1.442695
    %v250 = vpow.pop %v249
    %v251 = vsel %vm233, %v250, 0.0
    %252 = vadd.xlane.f32.xlu0 %v251
    %v253 = vpop.xlane.xlu0 %252
    %v254 = vadd.f32 %v242, %v253
    %vm255 = vcmask 7168
    %256 = vst.msk [vmem:[#allocation3] sm:$0xff] %vm255, %v254
    %257 = vst.msk [vmem:[#allocation2] sm:$0xff] %vm255, %v237
    %v258 = vld [vmem:[#allocation4] sm:$0xff]
    %v259 = vsel %vm233, %v185, -inf
    %260 = vmax.xlane.f32.xlu0 %v259
    %v261 = vpop.xlane.xlu0 %260
    %v262 = vmax.f32 %v258, %v261
    %v263 = vld [vmem:[#allocation5] sm:$0xff]
    %v264 = vsub.f32 %v258, %v262
    %v265 = vmul.f32 %v264, 1.442695
    %v266 = vpow.pop %v265
    %v267 = vmul.f32 %v263, %v266
    %269 = vset.pattern.permute.xlu0 0
    %270 = vperm.xlu0 %269, %v262
    %v271 = vpop.permute.xlu0 %270
    %v273 = vsub.f32 %v185, %v271
    %v274 = vmul.f32 %v273, 1.442695
    %v275 = vpow.pop %v274
    %v276 = vsel %vm233, %v275, 0.0
    %277 = vadd.xlane.f32.xlu0 %v276
    %v278 = vpop.xlane.xlu0 %277
    %v279 = vadd.f32 %v267, %v278
    %280 = vst.msk [vmem:[#allocation5] sm:$0xff] %vm255, %v279
    %281 = vst.msk [vmem:[#allocation4] sm:$0xff] %vm255, %v262
    // Predicated region
    $region30: #{tpu_custom_call.1} parent=1 // pred_check
      %p282 = pneg %p20
    $region31: #{tpu_custom_call.1} parent=1 // pred_check_branch
      %284 = sbr.rel (%p282) target = $region33
    $region32: #{tpu_custom_call.1} parent=1 // pred_region
      %v285 = vmul.f32 %v31, %v32
      %v286 = vsel %vm37, %v285, 0.0
      %287 = vadd.xlane.f32.xlu0 %v286
      %v288 = vpop.xlane.xlu0 %287
      %v289 = vmul.f32 %v288, 2.0
      %v290 = vld [vmem:[#allocation3] sm:$0xff]
      %v291 = vld [vmem:[#allocation6] sm:$0xff]
      %v292 = vld [vmem:[#allocation2] sm:$0xff]
      %v293 = vsub.f32 %v291, %v292
      %v294 = vmul.f32 %v293, 1.442695
      %v295 = vpow.pop %v294
      %v296 = vsub.f32 %v290, %v295
      %v297 = vmax.f32 %v296, 1e-30
      %v298 = vld [vmem:[#allocation5] sm:$0xff]
      %v299 = vld [vmem:[#allocation7] sm:$0xff]
      %v300 = vld [vmem:[#allocation4] sm:$0xff]
      %v301 = vsub.f32 %v299, %v300
      %v302 = vmul.f32 %v301, 1.442695
      %v303 = vpow.pop %v302
      %v304 = vsub.f32 %v298, %v303
      %v305 = vmax.f32 %v304, 1e-30
      %v306 = vlog2.pop %v297
      %v307 = vmul.f32 %v306, 0.6931472
      %v308 = vadd.f32 %v292, %v307
      %v309 = vlog2.pop %v305
      %v310 = vmul.f32 %v309, 0.6931472
      %v311 = vadd.f32 %v300, %v310
      %v312 = vsub.f32 %v308, %v289
      %v313 = vsub.f32 %v311, %v289
      %v314 = vadd.f32 %v312, %v313
      %v315 = vsel %vm255, %v314, 0.0
      %316 = vadd.xlane.f32.xlu0 %v315
      %v317 = vpop.xlane.xlu0 %316
      %v318 = vrot.slane %v317, 4
      %v319 = vadd.f32 %v317, %v318
      %v320 = vrot.slane %v319, 2
      %v321 = vadd.f32 %v319, %v320
      %v322 = vrot.slane %v321, 1
      %v323 = vadd.f32 %v321, %v322
      %s324 = vtos %v323
      %v325 = vstv %s324
      %326 = vst [vmem:[#allocation8] sm:$0xff] %v325
    $region33: #{tpu_custom_call.1} parent=1 // pred_fallthru
      _
    // Predicated region
    $region34: #{tpu_custom_call.1} parent=1 // pred_check
      _
    $region35: #{tpu_custom_call.1} parent=1 // pred_check_branch
      %328 = sbr.rel (0) target = $region37
    $region36: #{tpu_custom_call.1} parent=1 // pred_region
      %s330 = ssub.s32 128, 128
      %331 = vsyncadd [#allocation9], %s330
      %s333 = sshll.u32 [#allocation8], 4
      %s334 = int_to_ptr.vmem [resolvable:$true] %s333
      %336 = dma.vmem_to_hbm [thread:$0]  %s334, 128, %s4, [#allocation9]
    $region37: #{tpu_custom_call.1} parent=1 // pred_fallthru
      _
    // Predicated region
    $region38: #{tpu_custom_call.1} parent=1 // pred_check
      _
    $region39: #{tpu_custom_call.1} parent=1 // pred_check_branch
      %338 = sbr.rel (0) target = $region41
    $region40: #{tpu_custom_call.1} parent=1 // pred_region
      %339 = dma.done [#allocation9], 128
    $region41: #{tpu_custom_call.1} parent=1 // pred_fallthru
      _
    %340 = vsyncpa [#allocation9], 1

</llo_original>
